<compile_context>
chip_gen: v5e
topology: v5e:2x2
jax: 0.10.0
libtpu: 0.0.40
codegen_flags: <defaults>
</compile_context>

<pallas_src>
import functools

import jax
import jax.numpy as jnp
from jax.experimental import pallas as pl
from jax.experimental.pallas import tpu as pltpu

LANE = 128  # vreg lane width; feature dims are padded to a multiple of this.


def _round_up(v, m):
    return ((v + m - 1) // m) * m


# ---------------------------------------------------------------------------
# Kernel: one grid step == one GNN layer.
#   a_ref : [N, N]      normalized adjacency   (resident across all layers)
#   x_ref : [N, F]      lane-padded input feats (read only at layer 0)
#   w_ref : [1, F, F]   this layer's zero-padded weight tile (pipelined DMA)
#   b_ref : [1, 1, F]   this layer's zero-padded bias
#   o_ref : [1, N, F]   this layer's slot of the output slab (pipelined writeback)
#   h_ref : [N, F]      VMEM scratch carrying H across layers (persists over grid)
# Pad lanes of W/b are zero, so pad lanes of H stay exactly zero through the
# whole stage -> the lane-dense stores never leak garbage into x_list.
# ---------------------------------------------------------------------------
def _stage_kernel(a_ref, x_ref, w_ref, b_ref, o_ref, h_ref):
    layer = pl.program_id(0)

    @pl.when(layer == 0)
    def _():
        h_ref[...] = x_ref[...]          # seed the carry with the padded input

    h = h_ref[...]                       # [N, F]
    w = w_ref[0]                         # [F, F]
    b = b_ref[0]                         # [1, F]

    # GNNLayer(has_act=False):  H' = A_norm @ (H @ W) + b   (f32 MXU accumulation)
    hw = jnp.dot(h, w, preferred_element_type=jnp.float32)
    h_new = jnp.dot(a_ref[...], hw, preferred_element_type=jnp.float32) + b

    h_ref[...] = h_new                   # carry to next layer (stays in VMEM)
    o_ref[0] = h_new.astype(o_ref.dtype)  # full-width, lane-aligned, unmasked store


def gnn_stack_stage_concat(a_norm, x, params):
    """Forward of GNNStackStageConcat ('stack_concat') as one fused pallas_call.

    Returns (x_final, x_list) mirroring batch.x / batch.x_list.
    """
    n, dim_in = x.shape
    num_layers = len(params)
    dim_out = params[0][0].shape[1]
    d_feat = _round_up(max(dim_in, dim_out), LANE)   # lane-padded feature width

    # ---- wrapper-side packing / lane padding (layout-only, outside the kernel) ----
    x_pad = jnp.zeros((n, d_feat), jnp.float32).at[:, :dim_in].set(x)
    w_packed = jnp.zeros((num_layers, d_feat, d_feat), jnp.float32)
    b_packed = jnp.zeros((num_layers, 1, d_feat), jnp.float32)
    for i, (w, b) in enumerate(params):
        # Pad rows/cols are zero-filled so they contribute nothing to the matmuls.
        w_packed = w_packed.at[i, : w.shape[0], : w.shape[1]].set(w)
        b_packed = b_packed.at[i, :, : b.shape[1]].set(b)

    # ---- explicit VMEM budget (v5e scoped default is 16 MiB, v7x 32/64 MiB) ----
    f32 = 4
    resident = (a_norm.size + x_pad.size + n * d_feat) * f32           # A, X, H scratch
    per_step = 2 * (d_feat * d_feat + d_feat + n * d_feat) * f32       # dbl-buffered W,b,out
    vmem_limit = int(min(max(2 * (resident + per_step), 8 << 20), 32 << 20))

    out = pl.pallas_call(
        _stage_kernel,
        out_shape=jax.ShapeDtypeStruct((num_layers, n, d_feat), jnp.float32),
        grid_spec=pltpu.PrefetchScalarGridSpec(
            num_scalar_prefetch=0,
            grid=(num_layers,),
            in_specs=[
                pl.BlockSpec((n, n), lambda l: (0, 0)),                  # A (resident)
                pl.BlockSpec((n, d_feat), lambda l: (0, 0)),             # X (resident)
                pl.BlockSpec((1, d_feat, d_feat), lambda l: (l, 0, 0)),  # W_l
                pl.BlockSpec((1, 1, d_feat), lambda l: (l, 0, 0)),       # b_l
            ],
            out_specs=pl.BlockSpec((1, n, d_feat), lambda l: (l, 0, 0)),
            scratch_shapes=[pltpu.VMEM((n, d_feat), jnp.float32)],
        ),
        compiler_params=pltpu.CompilerParams(
            # Layers are sequentially dependent through the VMEM carry ->
            # the layer axis must be "arbitrary".  For N >> 128, split the stage
            # per layer with a row-tiled "parallel" grid (or batch many graphs on
            # a leading "parallel" axis) to feed v7x's second TensorCore; at N=32
            # that would be pure per-step overhead.
            dimension_semantics=("arbitrary",),
            vmem_limit_bytes=vmem_limit,
        ),
    )(a_norm, x_pad, w_packed, b_packed)

    x_list = [out[i, :, :dim_out] for i in range(num_layers)]
    # TODO(synk): GraphSizeNorm / skipsum_concat / skipconcat_concat branches are
    # disabled by the assumed config ('stack_concat', gsn=False) and not emitted.
    return x_list[-1], x_list


# ---------------------------------------------------------------------------
# Deterministic parameter / graph construction
# ---------------------------------------------------------------------------
def build_params(key, dim_in, dim_out, num_layers):
    params = []
    for i in range(num_layers):
        d_in = dim_in if i == 0 else dim_out      # 'stack_concat'
        key, kw, kb = jax.random.split(key, 3)
        scale = jnp.sqrt(2.0 / (d_in + dim_out)).astype(jnp.float32)
        w = jax.random.normal(kw, (d_in, dim_out), dtype=jnp.float32) * scale
        b = jax.random.normal(kb, (1, dim_out), dtype=jnp.float32) * 0.01
        params.append((w, b))
    return params


def build_normalized_adjacency(num_nodes):
    """Ring graph + self loops, symmetric normalization D^-1/2 (A+I) D^-1/2."""
    idx = jnp.arange(num_nodes)
    adj = jnp.zeros((num_nodes, num_nodes), dtype=jnp.float32)
    adj = adj.at[idx, (idx + 1) % num_nodes].set(1.0)
    adj = adj.at[(idx + 1) % num_nodes, idx].set(1.0)
    adj = adj + jnp.eye(num_nodes, dtype=jnp.float32)
    deg = adj.sum(axis=1)
    d_inv_sqrt = 1.0 / jnp.sqrt(deg)
    return adj * d_inv_sqrt[:, None] * d_inv_sqrt[None, :]


# Pure-JAX reference for correctness checking.
def reference_stage(a_norm, x, params):
    x_list = []
    for (w, b) in params:
        x = a_norm @ (x @ w) + b
        x_list.append(x)
    return x, x_list


if __name__ == "__main__":
    num_nodes = 32
    dim_in = 16
    dim_out = 32
    num_layers = 3

    key = jax.random.PRNGKey(0)
    key, kx = jax.random.split(key)
    x = jax.random.normal(kx, (num_nodes, dim_in), dtype=jnp.float32)
    a_norm = build_normalized_adjacency(num_nodes)
    params = build_params(key, dim_in, dim_out, num_layers)

    x_final, x_list = gnn_stack_stage_concat(a_norm, x, params)
    x_final = jax.block_until_ready(x_final)
    x_list = [jax.block_until_ready(xl) for xl in x_list]

    x_ref, x_list_ref = reference_stage(a_norm, x, params)
    assert x_final.shape == (num_nodes, dim_out)
    assert len(x_list) == num_layers
    assert jnp.allclose(x_final, x_ref, atol=1e-4, rtol=1e-4)
    for got, ref in zip(x_list, x_list_ref):
        assert got.shape == ref.shape
        assert jnp.allclose(got, ref, atol=1e-4, rtol=1e-4)

    print("KERNEL_OK")
</pallas_src>

<mosaic_0001>
module attributes {stable_mosaic.version = 11 : i64} {
  func.func @_stage_kernel(%arg0: i32, %arg1: memref<32x32xf32, #tpu.memory_space<vmem>>, %arg2: memref<32x128xf32, #tpu.memory_space<vmem>>, %arg3: memref<1x128x128xf32, #tpu.memory_space<vmem>>, %arg4: memref<1x1x128xf32, #tpu.memory_space<vmem>>, %arg5: memref<1x32x128xf32, #tpu.memory_space<vmem>>, %arg6: memref<32x128xf32, #tpu.memory_space<vmem>>) attributes {dimension_semantics = [#tpu.dimension_semantics<arbitrary>], iteration_bounds = array<i64: 3>, scalar_prefetch = 0 : i64, scratch_operands = 1 : i64, tpu.core_type = #tpu.core_type<tc>, window_params = [{pipeline_mode = #tpu.pipeline_mode<synchronous>, transform_indices = @transform_0, window_bounds = array<i64: 32, 32>}, {pipeline_mode = #tpu.pipeline_mode<synchronous>, transform_indices = @transform_1, window_bounds = array<i64: 32, 128>}, {transform_indices = @transform_2, window_bounds = array<i64: 1, 128, 128>}, {transform_indices = @transform_3, window_bounds = array<i64: 1, 1, 128>}, {transform_indices = @transform_4, window_bounds = array<i64: 1, 32, 128>}]} {
    %c0_i32 = arith.constant 0 : i32
    %0 = arith.cmpi eq, %arg0, %c0_i32 : i32
    %1 = arith.extui %0 : i1 to i32
    %c0_i32_0 = arith.constant 0 : i32
    %2 = arith.cmpi ne, %1, %c0_i32_0 : i32
    scf.if %2 {
      %c0_16 = arith.constant 0 : index
      %c0_17 = arith.constant 0 : index
      %17 = vector.load %arg2[%c0_16, %c0_17] : memref<32x128xf32, #tpu.memory_space<vmem>>, vector<32x128xf32>
      %c0_18 = arith.constant 0 : index
      %c0_19 = arith.constant 0 : index
      %18 = vector.load %arg6[%c0_18, %c0_19] : memref<32x128xf32, #tpu.memory_space<vmem>>, vector<32x128xf32>
      tpu.vector_store %arg6[%c0_18, %c0_19], %17 {strides = array<i32>} : memref<32x128xf32, #tpu.memory_space<vmem>>, vector<32x128xf32>,
    } else {
    }
    %c0 = arith.constant 0 : index
    %c0_1 = arith.constant 0 : index
    %3 = vector.load %arg6[%c0, %c0_1] : memref<32x128xf32, #tpu.memory_space<vmem>>, vector<32x128xf32>
    %c0_2 = arith.constant 0 : index
    %c0_3 = arith.constant 0 : index
    %c0_4 = arith.constant 0 : index
    %4 = vector.load %arg3[%c0_2, %c0_3, %c0_4] : memref<1x128x128xf32, #tpu.memory_space<vmem>>, vector<1x128x128xf32>
    %5 = vector.shape_cast %4 : vector<1x128x128xf32> to vector<128x128xf32>
    %c0_5 = arith.constant 0 : index
    %c0_6 = arith.constant 0 : index
    %c0_7 = arith.constant 0 : index
    %6 = vector.load %arg4[%c0_5, %c0_6, %c0_7] : memref<1x1x128xf32, #tpu.memory_space<vmem>>, vector<1x1x128xf32>
    %7 = vector.shape_cast %6 : vector<1x1x128xf32> to vector<1x128xf32>
    %cst = arith.constant dense<0.000000e+00> : vector<32x128xf32>
    %8 = tpu.matmul %3, %5, %cst {dimension_numbers = #tpu.dot_dimension_numbers<[1], [0], [0], [1], [0, 0, 1, 1], [], []>} : vector<32x128xf32>, vector<128x128xf32>, vector<32x128xf32> -> vector<32x128xf32>
    %c0_8 = arith.constant 0 : index
    %c0_9 = arith.constant 0 : index
    %9 = vector.load %arg1[%c0_8, %c0_9] : memref<32x32xf32, #tpu.memory_space<vmem>>, vector<32x32xf32>
    %cst_10 = arith.constant dense<0.000000e+00> : vector<32x128xf32>
    %10 = tpu.matmul %9, %8, %cst_10 {dimension_numbers = #tpu.dot_dimension_numbers<[1], [0], [0], [1], [0, 0, 1, 1], [], []>} : vector<32x32xf32>, vector<32x128xf32>, vector<32x128xf32> -> vector<32x128xf32>
    %11 = vector.broadcast %7 : vector<1x128xf32> to vector<32x128xf32>
    %12 = arith.addf %10, %11 : vector<32x128xf32>
    %c0_11 = arith.constant 0 : index
    %c0_12 = arith.constant 0 : index
    %13 = vector.load %arg6[%c0_11, %c0_12] : memref<32x128xf32, #tpu.memory_space<vmem>>, vector<32x128xf32>
    tpu.vector_store %arg6[%c0_11, %c0_12], %12 {strides = array<i32>} : memref<32x128xf32, #tpu.memory_space<vmem>>, vector<32x128xf32>,
    %c0_13 = arith.constant 0 : index
    %c0_14 = arith.constant 0 : index
    %c0_15 = arith.constant 0 : index
    %14 = vector.load %arg5[%c0_13, %c0_14, %c0_15] : memref<1x32x128xf32, #tpu.memory_space<vmem>>, vector<1x32x128xf32>
    %15 = vector.shape_cast %14 : vector<1x32x128xf32> to vector<32x128xf32>
    %16 = vector.shape_cast %12 : vector<32x128xf32> to vector<1x32x128xf32>
    tpu.vector_store %arg5[%c0_13, %c0_14, %c0_15], %16 {strides = array<i32>} : memref<1x32x128xf32, #tpu.memory_space<vmem>>, vector<1x32x128xf32>,
    return
  }
  func.func @transform_0(%arg0: i32) -> (i32, i32) {
    %c0_i32 = arith.constant 0 : i32
    %c0_i32_0 = arith.constant 0 : i32
    %c0_i32_1 = arith.constant 0 : i32
    return %c0_i32, %c0_i32_0 : i32, i32
  }
  func.func @transform_1(%arg0: i32) -> (i32, i32) {
    %c0_i32 = arith.constant 0 : i32
    %c0_i32_0 = arith.constant 0 : i32
    %c0_i32_1 = arith.constant 0 : i32
    return %c0_i32, %c0_i32_0 : i32, i32
  }
  func.func @transform_2(%arg0: i32) -> (i32, i32, i32) {
    %c0_i32 = arith.constant 0 : i32
    %c0_i32_0 = arith.constant 0 : i32
    %c0_i32_1 = arith.constant 0 : i32
    return %arg0, %c0_i32, %c0_i32_0 : i32, i32, i32
  }
  func.func @transform_3(%arg0: i32) -> (i32, i32, i32) {
    %c0_i32 = arith.constant 0 : i32
    %c0_i32_0 = arith.constant 0 : i32
    %c0_i32_1 = arith.constant 0 : i32
    return %arg0, %c0_i32, %c0_i32_0 : i32, i32, i32
  }
  func.func @transform_4(%arg0: i32) -> (i32, i32, i32) {
    %c0_i32 = arith.constant 0 : i32
    %c0_i32_0 = arith.constant 0 : i32
    %c0_i32_1 = arith.constant 0 : i32
    return %arg0, %c0_i32, %c0_i32_0 : i32, i32, i32
  }
}

</mosaic_0001>

<llo_original>
// kernel: tpu_custom_call.1
$region0: #{tpu_custom_call.1}
  #allocation0 [shape = 'u32[]', space=smem, size = 0x4, offset = 0x4, fixed_abs, tag = 'smem constant byte address 0x4 - core index']
  #allocation1 [shape = 'u32[72,128]{1,0:T(1,128)}', space=vmem, size = 0x9000, scoped, tag = 'internal scratch']
  #allocation2 [shape = 'f32[32,128]{1,0:T(8,128)}', space=vmem, size = 0x4000, scoped, tag = 'scratch operand']
  %s0 = inlined_call_operand.hbm [shape: f32[32,32], index: 0, kind: input, shape index: {}]
  %s1 = inlined_call_operand.hbm [shape: f32[32,128], index: 1, kind: input, shape index: {}]
  %s2 = inlined_call_operand.hbm [shape: f32[3,128,128], index: 2, kind: input, shape index: {}]
  %s3 = inlined_call_operand.hbm [shape: f32[3,1,128], index: 3, kind: input, shape index: {}]
  %s4 = inlined_call_operand.hbm [shape: f32[3,32,128], index: 4, kind: output, shape index: {}]
  %s5 = sld [smem:[#allocation0]]
  $region69: #{tpu_custom_call.1} parent=0
    _
  %s7 = ssub.s32 1, %s5
  %s8 = scalar_select 0, %s7, %s5
  $region1: #{tpu_custom_call.1} parent=0
    #allocation3 [shape = 'u8[16384]{0}', space=vmem, size = 0x4000, scoped, tag = 'input window, operand 0, single buffered']
    #allocation4 [shape = 's32[2]{0}', space=sflag, size = 0x8, scoped, tag = 'scoped memory for tpu_custom_call.1']
    #allocation5 [shape = 's32[2]{0}', space=sflag, size = 0x8, scoped, tag = 'scoped memory for tpu_custom_call.1']
    #allocation6 [shape = 'u8[16384]{0}', space=vmem, size = 0x4000, scoped, tag = 'input window, operand 1, single buffered']
    #allocation7 [shape = 's32[1]{0}', space=sflag, size = 0x4, scoped, tag = 'scoped memory for tpu_custom_call.1']
    #allocation8 [shape = 'u8[131072]{0}', space=vmem, size = 0x20000, scoped, tag = 'input window, operand 2']
    #allocation9 [shape = 'u8[1024]{0}', space=vmem, size = 0x400, scoped, tag = 'input window, operand 3']
    #allocation10 [shape = 'u8[32768]{0}', space=vmem, size = 0x8000, scoped, tag = 'output window, operand 0']
    %9 = vsyncpa [#allocation4], 0
    %10 = vsyncpa [#allocation7], 0
    %11 = vsyncpa [#allocation5], 0
    %s12 = scalar_lea.sflag [#allocation5], 1
    %13 = vsyncpa %s12, 0
    loop: start=0, step=1, limit=5
    $region2: #{tpu_custom_call.1} parent=1 // loop_pre_header
      _
    $region3: #{tpu_custom_call.1} parent=1 // loop_header
      %s15 = sphi 0, %s19
      %p16 = scmp.ge.s32.totalorder %s15, 5
      %s23 = sphi 0, %s23
      %s25 = sphi 0, %s23
      %s26 = sphi 0, %s25
      %s40 = sphi 0, %s26
      %s44 = sphi 0, %s44
      %s46 = sphi 0, %s44
      %s47 = sphi 0, %s46
      %s61 = sphi 0, %s47
      %s67 = sphi 0, %s69
      %s70 = sphi 0, %s67
      %s71 = sphi 0, %s70
      %s87 = sphi 0, %s71
      %s93 = sphi 0, %s95
      %s96 = sphi 0, %s93
      %s97 = sphi 0, %s96
      %s113 = sphi 0, %s97
      %s119 = sphi 0, %s121
      %s122 = sphi 0, %s119
      %s123 = sphi 0, %s122
      %s139 = sphi 0, %s123
    $region4: #{tpu_custom_call.1} parent=1 // loop_header_branch
      %18 = sbr.rel (%p16) target = $region8
    $region5: #{tpu_custom_call.1} parent=1 // loop_body
      %s20 = ssub.s32 %s15, 1
      %s21 = ssub.s32 %s15, 2
      %s22 = sadd.s32 %s15, 1
      %s24 = sadd.s32 %s23, 1
      %p27 = scmp.eq.s32.totalorder %s15, 2
      %p28 = scmp.ne.s32.totalorder %s23, %s25
      %p29 = scmp.eq.s32.totalorder %s15, 0
      %p30 = por %p28, %p29
      %p31 = scmp.ne.s32.totalorder %s23, %s25
      %p32 = scmp.eq.s32.totalorder %s20, 2
      %p33 = por %p31, %p32
      %p34 = scmp.ne.s32.totalorder %s25, %s26
      %p35 = scmp.eq.s32.totalorder %s20, 0
      %p36 = por %p34, %p35
      %p37 = scmp.ne.s32.totalorder %s25, %s26
      %p38 = scmp.eq.s32.totalorder %s21, 2
      %p39 = por %p37, %p38
      %p41 = scmp.ne.s32.totalorder %s26, %s40
      %p42 = scmp.eq.s32.totalorder %s21, 0
      %p43 = por %p41, %p42
      %s45 = sadd.s32 %s44, 1
      %p48 = scmp.eq.s32.totalorder %s15, 2
      %p49 = scmp.ne.s32.totalorder %s44, %s46
      %p50 = scmp.eq.s32.totalorder %s15, 0
      %p51 = por %p49, %p50
      %p52 = scmp.ne.s32.totalorder %s44, %s46
      %p53 = scmp.eq.s32.totalorder %s20, 2
      %p54 = por %p52, %p53
      %p55 = scmp.ne.s32.totalorder %s46, %s47
      %p56 = scmp.eq.s32.totalorder %s20, 0
      %p57 = por %p55, %p56
      %p58 = scmp.ne.s32.totalorder %s46, %s47
      %p59 = scmp.eq.s32.totalorder %s21, 2
      %p60 = por %p58, %p59
      %p62 = scmp.ne.s32.totalorder %s47, %s61
      %p63 = scmp.eq.s32.totalorder %s21, 0
      %p64 = por %p62, %p63
      %s65 = ssub.s32 %s15, %s22
      %p66 = scmp.eq.s32.totalorder %s65, 0
      %s68 = sadd.s32 %s67, 1
      %s69 = scalar_select %p66, %s67, %s68
      %p72 = pneg %p66
      %p73 = scmp.eq.s32.totalorder %s15, 2
      %p74 = por %p72, %p73
      %p75 = scmp.ne.s32.totalorder %s67, %s70
      %p76 = scmp.eq.s32.totalorder %s15, 0
      %p77 = por %p75, %p76
      %p78 = scmp.ne.s32.totalorder %s67, %s70
      %p79 = scmp.eq.s32.totalorder %s20, 2
      %p80 = por %p78, %p79
      %p81 = scmp.ne.s32.totalorder %s70, %s71
      %p82 = scmp.eq.s32.totalorder %s20, 0
      %p83 = por %p81, %p82
      %p84 = scmp.ne.s32.totalorder %s70, %s71
      %p85 = scmp.eq.s32.totalorder %s21, 2
      %p86 = por %p84, %p85
      %p88 = scmp.ne.s32.totalorder %s71, %s87
      %p89 = scmp.eq.s32.totalorder %s21, 0
      %p90 = por %p88, %p89
      %s91 = ssub.s32 %s15, %s22
      %p92 = scmp.eq.s32.totalorder %s91, 0
      %s94 = sadd.s32 %s93, 1
      %s95 = scalar_select %p92, %s93, %s94
      %p98 = pneg %p92
      %p99 = scmp.eq.s32.totalorder %s15, 2
      %p100 = por %p98, %p99
      %p101 = scmp.ne.s32.totalorder %s93, %s96
      %p102 = scmp.eq.s32.totalorder %s15, 0
      %p103 = por %p101, %p102
      %p104 = scmp.ne.s32.totalorder %s93, %s96
      %p105 = scmp.eq.s32.totalorder %s20, 2
      %p106 = por %p104, %p105
      %p107 = scmp.ne.s32.totalorder %s96, %s97
      %p108 = scmp.eq.s32.totalorder %s20, 0
      %p109 = por %p107, %p108
      %p110 = scmp.ne.s32.totalorder %s96, %s97
      %p111 = scmp.eq.s32.totalorder %s21, 2
      %p112 = por %p110, %p111
      %p114 = scmp.ne.s32.totalorder %s97, %s113
      %p115 = scmp.eq.s32.totalorder %s21, 0
      %p116 = por %p114, %p115
      %s117 = ssub.s32 %s15, %s22
      %p118 = scmp.eq.s32.totalorder %s117, 0
      %s120 = sadd.s32 %s119, 1
      %s121 = scalar_select %p118, %s119, %s120
      %p124 = pneg %p118
      %p125 = scmp.eq.s32.totalorder %s15, 2
      %p126 = por %p124, %p125
      %p127 = scmp.ne.s32.totalorder %s119, %s122
      %p128 = scmp.eq.s32.totalorder %s15, 0
      %p129 = por %p127, %p128
      %p130 = scmp.ne.s32.totalorder %s119, %s122
      %p131 = scmp.eq.s32.totalorder %s20, 2
      %p132 = por %p130, %p131
      %p133 = scmp.ne.s32.totalorder %s122, %s123
      %p134 = scmp.eq.s32.totalorder %s20, 0
      %p135 = por %p133, %p134
      %p136 = scmp.ne.s32.totalorder %s122, %s123
      %p137 = scmp.eq.s32.totalorder %s21, 2
      %p138 = por %p136, %p137
      %p140 = scmp.ne.s32.totalorder %s123, %s139
      %p141 = scmp.eq.s32.totalorder %s21, 0
      %p142 = por %p140, %p141
      %p143 = scmp.le.s32.totalorder 1, %s15
      %p144 = scmp.lt.s32.totalorder %s15, 4
      %p145 = pnand %p143, %p144
      %p146 = pneg %p145
      // Predicated region
      $region9: #{tpu_custom_call.1} parent=5 // pred_check
        _
      $region10: #{tpu_custom_call.1} parent=5 // pred_check_branch
        %148 = sbr.rel (%p145) target = $region12
      $region11: #{tpu_custom_call.1} parent=5 // pred_region
        %s149 = ssub.s32 %s15, 1
        // Predicated region
        $region13: #{tpu_custom_call.1} parent=11 // pred_check
          %p150 = pneg %p36
        $region14: #{tpu_custom_call.1} parent=11 // pred_check_branch
          %152 = sbr.rel (%p150) target = $region16
        $region15: #{tpu_custom_call.1} parent=11 // pred_region
          %154 = vsyncadd [#allocation4], 0
          %s155 = sshll.u32 %s0, 4
          %s156 = int_to_ptr.hbm [resolvable:$true] %s155
          %s157 = sshll.u32 [#allocation3], 4
          %s158 = int_to_ptr.vmem [resolvable:$true] %s157
          %163 = dma.hbm_to_vmem [thread:$0]  %s156, 512, %s158, [#allocation4], 128, 128, 8
        $region16: #{tpu_custom_call.1} parent=11 // pred_fallthru
          _
        // Predicated region
        $region17: #{tpu_custom_call.1} parent=11 // pred_check
          %p164 = pneg %p57
        $region18: #{tpu_custom_call.1} parent=11 // pred_check_branch
          %166 = sbr.rel (%p164) target = $region20
        $region19: #{tpu_custom_call.1} parent=11 // pred_region
          %168 = vsyncadd [#allocation7], 0
          %s169 = sshll.u32 %s1, 4
          %s170 = int_to_ptr.hbm [resolvable:$true] %s169
          %s171 = sshll.u32 [#allocation6], 4
          %s172 = int_to_ptr.vmem [resolvable:$true] %s171
          %177 = dma.hbm_to_vmem [thread:$0]  %s170, 512, %s172, [#allocation7], 128, 128, 8
        $region20: #{tpu_custom_call.1} parent=11 // pred_fallthru
          _
      $region12: #{tpu_custom_call.1} parent=5 // pred_fallthru
        _
      %p178 = scmp.lt.s32.totalorder %s15, 3
      // Predicated region
      $region21: #{tpu_custom_call.1} parent=5 // pred_check
        %p179 = pneg %p178
      $region22: #{tpu_custom_call.1} parent=5 // pred_check_branch
        %181 = sbr.rel (%p179) target = $region24
      $region23: #{tpu_custom_call.1} parent=5 // pred_region
        // Predicated region
        $region25: #{tpu_custom_call.1} parent=23 // pred_check
          %p182 = pneg %p77
        $region26: #{tpu_custom_call.1} parent=23 // pred_check_branch
          %184 = sbr.rel (%p182) target = $region28
        $region27: #{tpu_custom_call.1} parent=23 // pred_region
          %s185 = sand.u32 %s15, 1
          %s186 = scalar_lea.sflag [#allocation4], %s185
          %s187 = sand.u32 %s67, 1
          %s188 = smul.addr %s187, 128
          %s189 = scalar_lea.vmem [#allocation8], %s188
          %191 = vsyncadd %s186, 0
          %s192 = smul.addr %s15, 16
          %s193 = smul.addr %s192, 8
          %s194 = scalar_lea.hbm %s2, %s193
          %s195 = sshll.u32 %s194, 4
          %s196 = int_to_ptr.hbm [resolvable:$true] %s195
          %s197 = sshll.u32 %s189, 4
          %s198 = int_to_ptr.vmem [resolvable:$true] %s197
          %203 = dma.hbm_to_vmem [thread:$0]  %s196, 2048, %s198, %s186, 128, 128, 8
        $region28: #{tpu_custom_call.1} parent=23 // pred_fallthru
          _
        // Predicated region
        $region29: #{tpu_custom_call.1} parent=23 // pred_check
          %p204 = pneg %p103
        $region30: #{tpu_custom_call.1} parent=23 // pred_check_branch
          %206 = sbr.rel (%p204) target = $region32
        $region31: #{tpu_custom_call.1} parent=23 // pred_region
          %s207 = sand.u32 %s15, 1
          %s208 = scalar_lea.sflag [#allocation4], %s207
          %s209 = sand.u32 %s93, 1
          %s210 = scalar_lea.vmem [#allocation9], %s209
          %212 = vsyncadd %s208, 0
          %s213 = scalar_lea.hbm %s3, %s15
          %s215 = sshll.u32 %s213, 4
          %s216 = int_to_ptr.hbm [resolvable:$true] %s215
          %s217 = sshll.u32 %s210, 4
          %s218 = int_to_ptr.vmem [resolvable:$true] %s217
          %220 = dma.hbm_to_vmem [thread:$0]  %s216, 16, %s218, %s208
        $region32: #{tpu_custom_call.1} parent=23 // pred_fallthru
          _
      $region24: #{tpu_custom_call.1} parent=5 // pred_fallthru
        _
      %p221 = scmp.le.s32.totalorder 1, %s15
      %p222 = scmp.lt.s32.totalorder %s15, 4
      %p223 = pnand %p221, %p222
      %p224 = pneg %p223
      // Predicated region
      $region33: #{tpu_custom_call.1} parent=5 // pred_check
        _
      $region34: #{tpu_custom_call.1} parent=5 // pred_check_branch
        %226 = sbr.rel (%p223) target = $region36
      $region35: #{tpu_custom_call.1} parent=5 // pred_region
        %s227 = ssub.s32 %s15, 1
        // Predicated region
        $region37: #{tpu_custom_call.1} parent=35 // pred_check
          %p228 = pneg %p36
        $region38: #{tpu_custom_call.1} parent=35 // pred_check_branch
          %230 = sbr.rel (%p228) target = $region40
        $region39: #{tpu_custom_call.1} parent=35 // pred_region
          %232 = dma.done [#allocation4], 512
        $region40: #{tpu_custom_call.1} parent=35 // pred_fallthru
          _
        // Predicated region
        $region41: #{tpu_custom_call.1} parent=35 // pred_check
          %p233 = pneg %p57
        $region42: #{tpu_custom_call.1} parent=35 // pred_check_branch
          %235 = sbr.rel (%p233) target = $region44
        $region43: #{tpu_custom_call.1} parent=35 // pred_region
          %237 = dma.done [#allocation7], 512
        $region44: #{tpu_custom_call.1} parent=35 // pred_fallthru
          _
        %s238 = sand.u32 %s20, 1
        %s239 = scalar_lea.sflag [#allocation4], %s238
        %s240 = sand.u32 %s70, 1
        %s241 = smul.addr %s240, 128
        %s242 = scalar_lea.vmem [#allocation8], %s241
        // Predicated region
        $region45: #{tpu_custom_call.1} parent=35 // pred_check
          %p243 = pneg %p83
        $region46: #{tpu_custom_call.1} parent=35 // pred_check_branch
          %245 = sbr.rel (%p243) target = $region48
        $region47: #{tpu_custom_call.1} parent=35 // pred_region
          %247 = dma.done %s239, 2048
        $region48: #{tpu_custom_call.1} parent=35 // pred_fallthru
          _
        %s248 = sand.u32 %s20, 1
        %s249 = scalar_lea.sflag [#allocation4], %s248
        %s250 = sand.u32 %s96, 1
        %s251 = scalar_lea.vmem [#allocation9], %s250
        // Predicated region
        $region49: #{tpu_custom_call.1} parent=35 // pred_check
          %p252 = pneg %p109
        $region50: #{tpu_custom_call.1} parent=35 // pred_check_branch
          %254 = sbr.rel (%p252) target = $region52
        $region51: #{tpu_custom_call.1} parent=35 // pred_region
          %256 = dma.done %s249, 16
        $region52: #{tpu_custom_call.1} parent=35 // pred_fallthru
          _
        %p257 = pneg %p36
        %p258 = pneg %p33
        %p259 = pneg %p57
        %p260 = pneg %p54
        %s261 = sand.u32 %s20, 1
        %s262 = scalar_lea.sflag [#allocation4], %s261
        %s263 = sand.u32 %s70, 1
        %s264 = smul.addr %s263, 128
        %s265 = scalar_lea.vmem [#allocation8], %s264
        %p266 = pneg %p83
        %p267 = pneg %p80
        %s268 = sand.u32 %s20, 1
        %s269 = scalar_lea.sflag [#allocation4], %s268
        %s270 = sand.u32 %s96, 1
        %s271 = scalar_lea.vmem [#allocation9], %s270
        %p272 = pneg %p109
        %p273 = pneg %p106
        %p274 = pneg %p135
        %p275 = pneg %p132
        %s276 = sand.u32 %s122, 1
        %s277 = scalar_lea.sflag [#allocation5], %s276
        %s278 = sand.u32 %s122, 1
        %s279 = smul.addr %s278, 32
        %s280 = scalar_lea.vmem [#allocation10], %s279
        %p281 = scmp.eq.s32.totalorder %s20, 0
        // Predicated region
        $region53: #{tpu_custom_call.1} parent=35 // pred_check
          %p282 = pneg %p281
        $region54: #{tpu_custom_call.1} parent=35 // pred_check_branch
          %284 = sbr.rel (%p282) target = $region56
        $region55: #{tpu_custom_call.1} parent=35 // pred_region
          %v285 = vld [vmem:[#allocation6] sm:$0xff]
          %v286 = vld [vmem:[#allocation6 + $0x8] sm:$0xff]
          %v287 = vld [vmem:[#allocation6 + $0x10] sm:$0xff]
          %v288 = vld [vmem:[#allocation6 + $0x18] sm:$0xff]
          %289 = vst [vmem:[#allocation2] sm:$0xff] %v285
          %290 = vst [vmem:[#allocation2 + $0x8] sm:$0xff] %v286
          %291 = vst [vmem:[#allocation2 + $0x10] sm:$0xff] %v287
          %292 = vst [vmem:[#allocation2 + $0x18] sm:$0xff] %v288
        $region56: #{tpu_custom_call.1} parent=35 // pred_fallthru
          _
        %v293 = vld [vmem:[#allocation2] sm:$0xff]
        %v294 = vld [vmem:[#allocation2 + $0x8] sm:$0xff]
        %v295 = vld [vmem:[#allocation2 + $0x10] sm:$0xff]
        %v296 = vld [vmem:[#allocation2 + $0x18] sm:$0xff]
        %v297 = vld [vmem:[%s242] sm:$0xff]
        %v298 = vld [vmem:[%s242 + $0x8] sm:$0xff]
        %v299 = vld [vmem:[%s242 + $0x10] sm:$0xff]
        %v300 = vld [vmem:[%s242 + $0x18] sm:$0xff]
        %v301 = vld [vmem:[%s242 + $0x20] sm:$0xff]
        %v302 = vld [vmem:[%s242 + $0x28] sm:$0xff]
        %v303 = vld [vmem:[%s242 + $0x30] sm:$0xff]
        %v304 = vld [vmem:[%s242 + $0x38] sm:$0xff]
        %v305 = vld [vmem:[%s242 + $0x40] sm:$0xff]
        %v306 = vld [vmem:[%s242 + $0x48] sm:$0xff]
        %v307 = vld [vmem:[%s242 + $0x50] sm:$0xff]
        %v308 = vld [vmem:[%s242 + $0x58] sm:$0xff]
        %v309 = vld [vmem:[%s242 + $0x60] sm:$0xff]
        %v310 = vld [vmem:[%s242 + $0x68] sm:$0xff]
        %v311 = vld [vmem:[%s242 + $0x70] sm:$0xff]
        %v312 = vld [vmem:[%s242 + $0x78] sm:$0xff]
        %v313 = vld [vmem:[%s251] sm:$0x1]
        %314 = vmatpush.msra.mxu0 %v312
        %315 = vmatpush.msra.mxu0 %v311
        %316 = vmatpush.msra.mxu0 %v310
        %317 = vmatpush.msra.mxu0 %v309
        %318 = vmatpush.msra.mxu0 %v308
        %319 = vmatpush.msra.mxu0 %v307
        %320 = vmatpush.msra.mxu0 %v306
        %321 = vmatpush.msra.mxu0 %v305
        %322 = vmatpush.msra.mxu0 %v304
        %323 = vmatpush.msra.mxu0 %v303
        %324 = vmatpush.msra.mxu0 %v302
        %325 = vmatpush.msra.mxu0 %v301
        %326 = vmatpush.msra.mxu0 %v300
        %327 = vmatpush.msra.mxu0 %v299
        %328 = vmatpush.msra.mxu0 %v298
        %329 = vmatpush.msra.mxu0 %v297
        %330 = vmatmul.f32.gmra.mxu0 %v293
        %v331 = vpop.f32.mrf.mxu0
        %v332 = vadd.f32 0.0, %v331
        %333 = vmatmul.f32.gmra.mxu0 %v294
        %v334 = vpop.f32.mrf.mxu0
        %v335 = vadd.f32 0.0, %v334
        %336 = vmatmul.f32.gmra.mxu0 %v295
        %v337 = vpop.f32.mrf.mxu0
        %v338 = vadd.f32 0.0, %v337
        %339 = vmatmul.f32.gmra.mxu0 %v296
        %v340 = vpop.f32.mrf.mxu0
        %v341 = vadd.f32 0.0, %v340
        %342 = vdwg.mxu0
        %v343 = vld [vmem:[#allocation3] sm:$0xff]
        %v344 = vld [vmem:[#allocation3 + $0x8] sm:$0xff]
        %v345 = vld [vmem:[#allocation3 + $0x10] sm:$0xff]
        %v346 = vld [vmem:[#allocation3 + $0x18] sm:$0xff]
        %v348 = vperm.slane %v313, 0
        %vm350 = vcmask 261120
        %v352 = vsel %vm350, %v343, 0
        %v355 = vsel %vm350, %v344, 0
        %v358 = vsel %vm350, %v345, 0
        %v361 = vsel %vm350, %v346, 0
        %363 = vmatpush.msra.mxu0 0.0
        %364 = vmatpush.msra.mxu0 0.0
        %365 = vmatpush.msra.mxu0 0.0
        %366 = vmatpush.msra.mxu0 0.0
        %367 = vmatpush.msra.mxu0 0.0
        %368 = vmatpush.msra.mxu0 0.0
        %369 = vmatpush.msra.mxu0 0.0
        %370 = vmatpush.msra.mxu0 0.0
        %371 = vmatpush.msra.mxu0 0.0
        %372 = vmatpush.msra.mxu0 0.0
        %373 = vmatpush.msra.mxu0 0.0
        %374 = vmatpush.msra.mxu0 0.0
        %375 = vmatpush.msra.mxu0 %v341
        %376 = vmatpush.msra.mxu0 %v338
        %377 = vmatpush.msra.mxu0 %v335
        %378 = vmatpush.msra.mxu0 %v332
        %379 = vmatmul.f32.gmra.mxu0 %v352
        %v380 = vpop.f32.mrf.mxu0
        %v381 = vadd.f32 %v348, %v380
        %382 = vmatmul.f32.gmra.mxu0 %v355
        %v383 = vpop.f32.mrf.mxu0
        %v384 = vadd.f32 %v348, %v383
        %385 = vmatmul.f32.gmra.mxu0 %v358
        %v386 = vpop.f32.mrf.mxu0
        %v387 = vadd.f32 %v348, %v386
        %388 = vmatmul.f32.gmra.mxu0 %v361
        %v389 = vpop.f32.mrf.mxu0
        %v390 = vadd.f32 %v348, %v389
        %391 = vdwg.mxu0
        %392 = vst [vmem:[#allocation2] sm:$0xff] %v381
        %393 = vst [vmem:[#allocation2 + $0x8] sm:$0xff] %v384
        %394 = vst [vmem:[#allocation2 + $0x10] sm:$0xff] %v387
        %395 = vst [vmem:[#allocation2 + $0x18] sm:$0xff] %v390
        %396 = vst [vmem:[%s280] sm:$0xff] %v381
        %397 = vst [vmem:[%s280 + $0x8] sm:$0xff] %v384
        %398 = vst [vmem:[%s280 + $0x10] sm:$0xff] %v387
        %399 = vst [vmem:[%s280 + $0x18] sm:$0xff] %v390
        %s400 = sand.u32 %s122, 1
        %s401 = scalar_lea.sflag [#allocation5], %s400
        %s402 = sand.u32 %s122, 1
        %s403 = smul.addr %s402, 32
        %s404 = scalar_lea.vmem [#allocation10], %s403
        // Predicated region
        $region57: #{tpu_custom_call.1} parent=35 // pred_check
          %p405 = pneg %p132
        $region58: #{tpu_custom_call.1} parent=35 // pred_check_branch
          %407 = sbr.rel (%p405) target = $region60
        $region59: #{tpu_custom_call.1} parent=35 // pred_region
          %409 = vsyncadd %s401, 0
          %s410 = smul.addr %s20, 4
          %s411 = smul.addr %s410, 8
          %s412 = scalar_lea.hbm %s4, %s411
          %s413 = sshll.u32 %s404, 4
          %s414 = int_to_ptr.vmem [resolvable:$true] %s413
          %s415 = sshll.u32 %s412, 4
          %s416 = int_to_ptr.hbm [resolvable:$true] %s415
          %421 = dma.vmem_to_hbm [thread:$0]  %s414, 512, %s416, %s401, 128, 128, 8
        $region60: #{tpu_custom_call.1} parent=35 // pred_fallthru
          _
      $region36: #{tpu_custom_call.1} parent=5 // pred_fallthru
        _
      %p422 = scmp.le.s32.totalorder 2, %s15
      // Predicated region
      $region61: #{tpu_custom_call.1} parent=5 // pred_check
        %p423 = pneg %p422
      $region62: #{tpu_custom_call.1} parent=5 // pred_check_branch
        %425 = sbr.rel (%p423) target = $region64
      $region63: #{tpu_custom_call.1} parent=5 // pred_region
        %s426 = ssub.s32 %s15, 2
        // Predicated region
        $region65: #{tpu_custom_call.1} parent=63 // pred_check
          %p427 = pneg %p138
        $region66: #{tpu_custom_call.1} parent=63 // pred_check_branch
          %429 = sbr.rel (%p427) target = $region68
        $region67: #{tpu_custom_call.1} parent=63 // pred_region
          %s430 = sand.u32 %s123, 1
          %s431 = scalar_lea.sflag [#allocation5], %s430
          %s432 = sand.u32 %s123, 1
          %s433 = smul.addr %s432, 32
          %s434 = scalar_lea.vmem [#allocation10], %s433
          %436 = dma.done %s431, 512
        $region68: #{tpu_custom_call.1} parent=63 // pred_fallthru
          _
      $region64: #{tpu_custom_call.1} parent=5 // pred_fallthru
        _
    $region6: #{tpu_custom_call.1} parent=1 // loop_footer
      %s19 = sadd.s32 1, %s15
    $region7: #{tpu_custom_call.1} parent=1 // loop_footer_branch
      %14 = sbr.rel target = $region3
    $region8: #{tpu_custom_call.1} parent=1 // loop_exit
      _
    %437 = vsyncpa [#allocation4], 1
    %s438 = scalar_lea.sflag [#allocation4], 1
    %439 = vsyncpa %s438, 1
    %440 = vsyncpa [#allocation7], 1
    %441 = vsyncpa [#allocation5], 1
    %s442 = scalar_lea.sflag [#allocation5], 1
    %443 = vsyncpa %s442, 1

</llo_original>
